<compile_context>
chip_gen: v7x
topology: tpu7x:2x2x1
jax: 0.10.0
libtpu: 0.0.40
codegen_flags: <defaults>
</compile_context>

<pallas_src>
import functools

import jax
import jax.numpy as jnp
from jax.experimental import pallas as pl
from jax.experimental.pallas import tpu as pltpu

_LANE = 128  # TPU lane width; last dim of every tile.


def _dopamine_scalar_p_kernel(p_ref, x_ref, r_ref, pnew_ref, *, alpha, beta):
    # p_ref: (1,) scalar P(t) in SMEM; x_ref: (TM, 128) signal tile in VMEM.
    p = p_ref[0]
    delta = x_ref[...] - p                      # S(t) - P(t)       (VPU)
    r_ref[...] = (alpha * delta).astype(r_ref.dtype)
    pnew_ref[...] = (p + beta * delta).astype(pnew_ref.dtype)


def _dopamine_elementwise_p_kernel(x_ref, p_ref, r_ref, pnew_ref, *, alpha, beta):
    # Both x and P(t) are (TM, 128) tiles (P already broadcast to signal shape
    # by a previous forward, matching the PyTorch buffer after one call).
    delta = x_ref[...] - p_ref[...]
    r_ref[...] = (alpha * delta).astype(r_ref.dtype)
    pnew_ref[...] = (p_ref[...] + beta * delta).astype(pnew_ref.dtype)


def _round_up(x, m):
    return ((x + m - 1) // m) * m


def reset_p(p_init: float = 0.0):
    """Equivalent of the module's registered buffer / reset()."""
    return jnp.full((1,), p_init, dtype=jnp.float32)


@functools.partial(jax.jit, static_argnames=("alpha", "beta"))
def dopamine_empathy_reward(empathy_signal, p, *, alpha: float = 30.0,
                            beta: float = 0.2):
    """Forward pass.  Returns (dopamine_reward, p_next).

    empathy_signal: any-shaped tensor S(t).
    p:              prediction buffer P(t) — shape (1,)/() on the first call,
                    or the signal's shape on later calls (PyTorch broadcast).
    """
    orig_shape = empathy_signal.shape
    out_dtype = empathy_signal.dtype

    x = empathy_signal.reshape(-1).astype(jnp.float32)
    n = x.shape[0]

    # Lane-dense layout: flatten to (rows, 128); tile rows.
    rows = -(-n // _LANE)
    tm = min(1024, _round_up(rows, 8))          # ≤1 MiB/tile (f32), safe on v7x
    rows_pad = _round_up(rows, tm)
    pad = rows_pad * _LANE - n
    if pad:
        x = jnp.pad(x, (0, pad))
    x2 = x.reshape(rows_pad, _LANE)

    grid = (rows_pad // tm,)
    tile_spec = pl.BlockSpec((tm, _LANE), lambda i: (i, 0))
    out_shape = [jax.ShapeDtypeStruct((rows_pad, _LANE), jnp.float32),
                 jax.ShapeDtypeStruct((rows_pad, _LANE), jnp.float32)]
    out_specs = [tile_spec, tile_spec]
    cparams = pltpu.CompilerParams(dimension_semantics=("parallel",))

    p_arr = jnp.asarray(p, jnp.float32)

    if p_arr.size == 1:
        # Scalar prediction buffer (the module's registered state): keep in SMEM.
        kernel = functools.partial(_dopamine_scalar_p_kernel,
                                   alpha=float(alpha), beta=float(beta))
        reward2, pnew2 = pl.pallas_call(
            kernel,
            grid=grid,
            in_specs=[
                pl.BlockSpec(memory_space=pltpu.MemorySpace.SMEM),  # P(t)
                tile_spec,                                          # S(t) tiles
            ],
            out_specs=out_specs,
            out_shape=out_shape,
            compiler_params=cparams,
        )(p_arr.reshape(1), x2)
    else:
        if p_arr.shape != orig_shape:
            raise ValueError(
                f"p must be scalar-shaped or match the signal shape; got "
                f"{p_arr.shape} vs {orig_shape}")
        pf = p_arr.reshape(-1)
        if pad:
            pf = jnp.pad(pf, (0, pad))
        p2 = pf.reshape(rows_pad, _LANE)
        kernel = functools.partial(_dopamine_elementwise_p_kernel,
                                   alpha=float(alpha), beta=float(beta))
        reward2, pnew2 = pl.pallas_call(
            kernel,
            grid=grid,
            in_specs=[tile_spec, tile_spec],
            out_specs=out_specs,
            out_shape=out_shape,
            compiler_params=cparams,
        )(x2, p2)

    reward = reward2.reshape(-1)[:n].reshape(orig_shape).astype(out_dtype)
    p_next = pnew2.reshape(-1)[:n].reshape(orig_shape).astype(out_dtype)
    return reward, p_next


if __name__ == "__main__":
    key = jax.random.PRNGKey(0)
    k1, k2, k3 = jax.random.split(key, 3)

    alpha, beta, p_init = 30.0, 0.2, 0.0

    # Step 1: small shape, scalar P(t) (fresh buffer).
    batch, seq, feat = 2, 8, 16
    s1 = jax.random.normal(k1, (batch, seq, feat), dtype=jnp.float32)
    p0 = reset_p(p_init)

    r1, p1 = dopamine_empathy_reward(s1, p0, alpha=alpha, beta=beta)
    r1, p1 = jax.block_until_ready((r1, p1))

    d1 = s1 - p0
    assert r1.shape == s1.shape, r1.shape
    assert jnp.allclose(r1, alpha * d1, atol=1e-6, rtol=1e-6), "reward mismatch (step 1)"
    assert jnp.allclose(p1, p0 + beta * d1, atol=1e-6, rtol=1e-6), "p update mismatch (step 1)"

    # Step 2: P(t) is now elementwise (PyTorch broadcast-grew the buffer).
    s2 = jax.random.normal(k2, (batch, seq, feat), dtype=jnp.float32)
    r2, p2 = dopamine_empathy_reward(s2, p1, alpha=alpha, beta=beta)
    r2, p2 = jax.block_until_ready((r2, p2))

    p1_ref = p0 + beta * d1
    d2 = s2 - p1_ref
    assert jnp.allclose(r2, alpha * d2, atol=1e-5, rtol=1e-5), "reward mismatch (step 2)"
    assert jnp.allclose(p2, p1_ref + beta * d2, atol=1e-5, rtol=1e-5), "p update mismatch (step 2)"

    # Ragged shape: exercises the lane/row padding + slicing path.
    s3 = jax.random.normal(k3, (3, 5, 37), dtype=jnp.float32)
    r3, p3 = dopamine_empathy_reward(s3, p0, alpha=alpha, beta=beta)
    r3, p3 = jax.block_until_ready((r3, p3))
    assert jnp.allclose(r3, alpha * (s3 - p0), atol=1e-6, rtol=1e-6), "reward mismatch (ragged)"
    assert jnp.allclose(p3, p0 + beta * (s3 - p0), atol=1e-6, rtol=1e-6), "p mismatch (ragged)"

    print("KERNEL_OK")
</pallas_src>

<mosaic_0001>
module attributes {stable_mosaic.version = 11 : i64} {
  func.func @_dopamine_scalar_p_kernel(%arg0: i32, %arg1: memref<1xf32, #tpu.memory_space<smem>>, %arg2: memref<8x128xf32, #tpu.memory_space<vmem>>, %arg3: memref<8x128xf32, #tpu.memory_space<vmem>>, %arg4: memref<8x128xf32, #tpu.memory_space<vmem>>) attributes {dimension_semantics = [#tpu.dimension_semantics<parallel>], iteration_bounds = array<i64: 1>, scalar_prefetch = 0 : i64, scratch_operands = 0 : i64, tpu.core_type = #tpu.core_type<tc>, window_params = [{transform_indices = @transform_0, window_bounds = array<i64: 1>}, {transform_indices = @transform_1, window_bounds = array<i64: 8, 128>}, {transform_indices = @transform_2, window_bounds = array<i64: 8, 128>}, {transform_indices = @transform_3, window_bounds = array<i64: 8, 128>}]} {
    %c0 = arith.constant 0 : index
    %0 = memref.load %arg1[%c0] : memref<1xf32, #tpu.memory_space<smem>>
    %c0_0 = arith.constant 0 : index
    %c0_1 = arith.constant 0 : index
    %1 = vector.load %arg2[%c0_0, %c0_1] : memref<8x128xf32, #tpu.memory_space<vmem>>, vector<8x128xf32>
    %2 = vector.broadcast %0 : f32 to vector<8x128xf32>
    %3 = arith.subf %1, %2 : vector<8x128xf32>
    %cst = arith.constant 3.000000e+01 : f32
    %4 = vector.broadcast %cst : f32 to vector<8x128xf32>
    %5 = arith.mulf %4, %3 : vector<8x128xf32>
    %c0_2 = arith.constant 0 : index
    %c0_3 = arith.constant 0 : index
    %6 = vector.load %arg3[%c0_2, %c0_3] : memref<8x128xf32, #tpu.memory_space<vmem>>, vector<8x128xf32>
    tpu.vector_store %arg3[%c0_2, %c0_3], %5 {strides = array<i32>} : memref<8x128xf32, #tpu.memory_space<vmem>>, vector<8x128xf32>,
    %cst_4 = arith.constant 2.000000e-01 : f32
    %7 = vector.broadcast %cst_4 : f32 to vector<8x128xf32>
    %8 = arith.mulf %7, %3 : vector<8x128xf32>
    %9 = vector.broadcast %0 : f32 to vector<8x128xf32>
    %10 = arith.addf %9, %8 : vector<8x128xf32>
    %c0_5 = arith.constant 0 : index
    %c0_6 = arith.constant 0 : index
    %11 = vector.load %arg4[%c0_5, %c0_6] : memref<8x128xf32, #tpu.memory_space<vmem>>, vector<8x128xf32>
    tpu.vector_store %arg4[%c0_5, %c0_6], %10 {strides = array<i32>} : memref<8x128xf32, #tpu.memory_space<vmem>>, vector<8x128xf32>,
    return
  }
  func.func @transform_0(%arg0: i32) -> i32 {
    %c0_i32 = arith.constant 0 : i32
    %c0_i32_0 = arith.constant 0 : i32
    return %c0_i32 : i32
  }
  func.func @transform_1(%arg0: i32) -> (i32, i32) {
    %c0_i32 = arith.constant 0 : i32
    %c0_i32_0 = arith.constant 0 : i32
    return %arg0, %c0_i32 : i32, i32
  }
  func.func @transform_2(%arg0: i32) -> (i32, i32) {
    %c0_i32 = arith.constant 0 : i32
    %c0_i32_0 = arith.constant 0 : i32
    return %arg0, %c0_i32 : i32, i32
  }
  func.func @transform_3(%arg0: i32) -> (i32, i32) {
    %c0_i32 = arith.constant 0 : i32
    %c0_i32_0 = arith.constant 0 : i32
    return %arg0, %c0_i32 : i32, i32
  }
}

</mosaic_0001>

<llo_original>
// kernel: dopamine_empathy_reward.1
$region0: #{dopamine_empathy_reward.1}
  #allocation0 [shape = 'u32[]', space=smem, size = 0x4, offset = 0x4, fixed_abs, tag = 'smem constant byte address 0x4 - core index']
  #allocation1 [shape = 'u32[144,128]{1,0:T(1,128)}', space=vmem, size = 0x12000, scoped, tag = 'internal scratch']
  #allocation2 [shape = 'f32[1]{0:T(128)S(6)}', space=smem, size = 0x200, scoped, tag = 'scoped memory for dopamine_empathy_reward.1']
  %s0 = inlined_call_operand.<no memory space> [shape: f32[1], index: 0, kind: input, shape index: {}]
  %s1 = inlined_call_operand.vmem [shape: f32[8,128], index: 1, kind: input, shape index: {}]
  %s2 = inlined_call_operand.vmem [shape: f32[8,128], index: 2, kind: output, shape index: {0}]
  %s3 = inlined_call_operand.vmem [shape: f32[8,128], index: 3, kind: output, shape index: {1}]
  %4 = xla_tuple %s2, %s3
  %s5 = sld [smem:[#allocation0]]
  $region26: #{dopamine_empathy_reward.1} parent=0
    _
  %s7 = ssub.s32 1, %s5
  %s8 = scalar_select 0, %s7, %s5
  %9 = sst [smem:[#allocation2]] %s0
  // Predicated region
  $region2: #{dopamine_empathy_reward.1} parent=0 // pred_check
    _
  $region3: #{dopamine_empathy_reward.1} parent=0 // pred_check_branch
    %11 = sbr.rel (0) target = $region5
  $region4: #{dopamine_empathy_reward.1} parent=0 // pred_region
    _
  $region5: #{dopamine_empathy_reward.1} parent=0 // pred_fallthru
    _
  // Predicated region
  $region6: #{dopamine_empathy_reward.1} parent=0 // pred_check
    _
  $region7: #{dopamine_empathy_reward.1} parent=0 // pred_check_branch
    %13 = sbr.rel (0) target = $region9
  $region8: #{dopamine_empathy_reward.1} parent=0 // pred_region
    _
  $region9: #{dopamine_empathy_reward.1} parent=0 // pred_fallthru
    _
  %s14 = sld [smem:[#allocation2]]
  %v15 = vld [vmem:[%s1] sm:$0xff]
  %v16 = vstv %s14
  %v17 = vsub.f32 %v15, %v16
  %v18 = vmul.f32 %v17, 30.0
  %19 = vst [vmem:[%s2] sm:$0xff] %v18
  %v20 = vmul.f32 %v17, 0.2
  %v21 = vadd.f32 %v16, %v20
  %22 = vst [vmem:[%s3] sm:$0xff] %v21
  // Predicated region
  $region10: #{dopamine_empathy_reward.1} parent=0 // pred_check
    _
  $region11: #{dopamine_empathy_reward.1} parent=0 // pred_check_branch
    %24 = sbr.rel (0) target = $region13
  $region12: #{dopamine_empathy_reward.1} parent=0 // pred_region
    _
  $region13: #{dopamine_empathy_reward.1} parent=0 // pred_fallthru
    _
  // Predicated region
  $region14: #{dopamine_empathy_reward.1} parent=0 // pred_check
    _
  $region15: #{dopamine_empathy_reward.1} parent=0 // pred_check_branch
    %26 = sbr.rel (0) target = $region17
  $region16: #{dopamine_empathy_reward.1} parent=0 // pred_region
    _
  $region17: #{dopamine_empathy_reward.1} parent=0 // pred_fallthru
    _
  // Predicated region
  $region18: #{dopamine_empathy_reward.1} parent=0 // pred_check
    _
  $region19: #{dopamine_empathy_reward.1} parent=0 // pred_check_branch
    %28 = sbr.rel (0) target = $region21
  $region20: #{dopamine_empathy_reward.1} parent=0 // pred_region
    _
  $region21: #{dopamine_empathy_reward.1} parent=0 // pred_fallthru
    _
  // Predicated region
  $region22: #{dopamine_empathy_reward.1} parent=0 // pred_check
    _
  $region23: #{dopamine_empathy_reward.1} parent=0 // pred_check_branch
    %30 = sbr.rel (0) target = $region25
  $region24: #{dopamine_empathy_reward.1} parent=0 // pred_region
    _
  $region25: #{dopamine_empathy_reward.1} parent=0 // pred_fallthru
    _

</llo_original>
